<compile_context>
chip_gen: v7x
topology: tpu7x:2x2x1
jax: 0.10.0
libtpu: 0.0.40
codegen_flags: <defaults>
</compile_context>

<pallas_src>
import functools

import jax
import jax.numpy as jnp
from jax.experimental import pallas as pl
from jax.experimental.pallas import tpu as pltpu


def _round_up(n, m):
    return ((n + m - 1) // m) * m


def baseline_kernel(x_ref, wc_ref, bc_ref, o_ref):
    # x_ref: (TB, C, H*W) in native dtype -- upcast in VMEM, lane-dense reduce.
    x = x_ref[...].astype(jnp.float32)
    pooled = jnp.mean(x, axis=-1)                      # (TB, C) == AdaptiveAvgPool2d(1)+flatten
    # Fused mlp_head: single MXU matmul with pre-fused, pre-padded weights/bias.
    out = jnp.dot(pooled, wc_ref[...], preferred_element_type=jnp.float32) + bc_ref[...]
    o_ref[...] = out.astype(o_ref.dtype)


def prepare_params(w1, b1, w2, b2):
    """One-time param prep (hoisted out of the forward path).

    Fuses the two bias-only Linears (no nonlinearity between them):
        (p @ w1 + b1) @ w2 + b2 == p @ (w1 @ w2) + (b1 @ w2 + b2)
    and zero-pads the class dim to 128 lanes for unmasked vector stores.
    Returns (wc_p, bc_p, num_classes).
    """
    num_classes = w2.shape[1]
    wc = jnp.dot(w1.astype(jnp.float32), w2.astype(jnp.float32),
                 preferred_element_type=jnp.float32)                  # (C, num_classes)
    bc = jnp.dot(b1.astype(jnp.float32), w2.astype(jnp.float32),
                 preferred_element_type=jnp.float32) + b2             # (1, num_classes)
    nc_pad = _round_up(max(num_classes, 1), 128)
    wc_p = jnp.zeros((wc.shape[0], nc_pad), jnp.float32).at[:, :num_classes].set(wc)
    bc_p = jnp.zeros((1, nc_pad), jnp.float32).at[:, :num_classes].set(bc)
    return wc_p, bc_p, num_classes


def _choose_tb(B, C, HW, itemsize, vmem_budget_bytes=16 << 20):
    """Largest multiple-of-8 batch tile whose double-buffered input stream fits
    the VMEM budget; at least 2 grid steps when B is large (v7x megacore)."""
    bytes_per_row = 2 * C * HW * itemsize          # x2 for double buffering
    max_tb = max(8, (vmem_budget_bytes // bytes_per_row) // 8 * 8)
    if B <= max_tb:
        return B                                    # single full-array block
    return min(max_tb, _round_up(pl.cdiv(B, 2), 8))


@functools.partial(jax.jit, static_argnames=("num_classes",))
def baseline_forward(x, wc_p, bc_p, num_classes):
    """x: (B, dim, H, W) any float dtype; wc_p/bc_p from prepare_params."""
    B, C, H, W = x.shape
    HW = H * W
    nc_pad = wc_p.shape[1]

    # Lane-dense pooling layout, native dtype (no HBM copy beyond the reshape).
    x_r = x.reshape(B, C, HW)

    TB = _choose_tb(B, C, HW, x.dtype.itemsize)
    grid = (pl.cdiv(B, TB),)

    cost = pl.CostEstimate(
        flops=2 * B * C * nc_pad + B * C * HW,
        transcendentals=0,
        bytes_accessed=B * C * HW * x.dtype.itemsize
        + C * nc_pad * 4 + nc_pad * 4 + B * nc_pad * 4,
    )

    out = pl.pallas_call(
        baseline_kernel,
        out_shape=jax.ShapeDtypeStruct((B, nc_pad), jnp.float32),
        grid_spec=pltpu.PrefetchScalarGridSpec(
            num_scalar_prefetch=0,
            grid=grid,
            in_specs=[
                pl.BlockSpec((TB, C, HW), lambda i: (i, 0, 0)),   # x: tiled over batch
                pl.BlockSpec((C, nc_pad), lambda i: (0, 0)),      # fused weight: resident
                pl.BlockSpec((1, nc_pad), lambda i: (0, 0)),      # fused bias: resident
            ],
            out_specs=pl.BlockSpec((TB, nc_pad), lambda i: (i, 0)),
        ),
        compiler_params=pltpu.CompilerParams(
            dimension_semantics=("parallel",),
            vmem_limit_bytes=48 << 20,   # covers v5e's 16 MiB scoped default at large TB
        ),
        cost_estimate=cost,
    )(x_r, wc_p, bc_p)

    return out[:, :num_classes]


def init_params(key, dim, mlp_dim, num_classes):
    """Deterministic init mimicking nn.Linear default (uniform +/- 1/sqrt(fan_in)).
    Weights stored transposed as (in, out) for the x @ W convention."""
    k1, k2, k3, k4 = jax.random.split(key, 4)
    bound1 = 1.0 / jnp.sqrt(dim)
    bound2 = 1.0 / jnp.sqrt(mlp_dim)
    w1 = jax.random.uniform(k1, (dim, mlp_dim), jnp.float32, -bound1, bound1)
    b1 = jax.random.uniform(k2, (1, mlp_dim), jnp.float32, -bound1, bound1)
    w2 = jax.random.uniform(k3, (mlp_dim, num_classes), jnp.float32, -bound2, bound2)
    b2 = jax.random.uniform(k4, (1, num_classes), jnp.float32, -bound2, bound2)
    return w1, b1, w2, b2


if __name__ == "__main__":
    # config['model'] = {'dim': 32, 'mlp-dim': 64, 'num-classes': 10}
    B, dim, H, W = 2, 32, 16, 16
    mlp_dim, num_classes = 64, 10

    key = jax.random.PRNGKey(0)
    kx, kp = jax.random.split(key)
    x = jax.random.normal(kx, (B, dim, H, W), dtype=jnp.float32)
    w1, b1, w2, b2 = init_params(kp, dim, mlp_dim, num_classes)

    # One-time param prep (fused + padded weights), then the forward pass.
    wc_p, bc_p, nc = prepare_params(w1, b1, w2, b2)
    out = baseline_forward(x, wc_p, bc_p, nc)
    out = jax.block_until_ready(out)

    # Pure-JAX reference (same math as the PyTorch module, unfused).
    pooled_ref = jnp.mean(x, axis=(2, 3))
    ref = (pooled_ref @ w1 + b1) @ w2 + b2
    assert out.shape == (B, num_classes)
    assert jnp.allclose(out, ref, atol=2e-5, rtol=2e-5)

    print("KERNEL_OK")
</pallas_src>

<mosaic_0001>
module attributes {stable_mosaic.version = 11 : i64} {
  func.func @baseline_kernel(%arg0: i32, %arg1: memref<2x32x256xf32, #tpu.memory_space<vmem>>, %arg2: memref<32x128xf32, #tpu.memory_space<vmem>>, %arg3: memref<1x128xf32, #tpu.memory_space<vmem>>, %arg4: memref<2x128xf32, #tpu.memory_space<vmem>>) attributes {dimension_semantics = [#tpu.dimension_semantics<parallel>], iteration_bounds = array<i64: 1>, scalar_prefetch = 0 : i64, scratch_operands = 0 : i64, tpu.core_type = #tpu.core_type<tc>, window_params = [{transform_indices = @transform_0, window_bounds = array<i64: 2, 32, 256>}, {pipeline_mode = #tpu.pipeline_mode<synchronous>, transform_indices = @transform_1, window_bounds = array<i64: 32, 128>}, {pipeline_mode = #tpu.pipeline_mode<synchronous>, transform_indices = @transform_2, window_bounds = array<i64: 1, 128>}, {transform_indices = @transform_3, window_bounds = array<i64: 2, 128>}]} {
    %c0 = arith.constant 0 : index
    %c0_0 = arith.constant 0 : index
    %c0_1 = arith.constant 0 : index
    %0 = vector.load %arg1[%c0, %c0_0, %c0_1] : memref<2x32x256xf32, #tpu.memory_space<vmem>>, vector<2x32x256xf32>
    %cst = arith.constant dense<0.000000e+00> : vector<2x32xf32>
    %1 = vector.multi_reduction <add>, %0, %cst [2] : vector<2x32x256xf32> to vector<2x32xf32>
    %cst_2 = arith.constant 2.560000e+02 : f32
    %2 = vector.broadcast %cst_2 : f32 to vector<2x32xf32>
    %3 = arith.divf %1, %2 : vector<2x32xf32>
    %c0_3 = arith.constant 0 : index
    %c0_4 = arith.constant 0 : index
    %4 = vector.load %arg2[%c0_3, %c0_4] : memref<32x128xf32, #tpu.memory_space<vmem>>, vector<32x128xf32>
    %cst_5 = arith.constant dense<0.000000e+00> : vector<2x128xf32>
    %5 = tpu.matmul %3, %4, %cst_5 {dimension_numbers = #tpu.dot_dimension_numbers<[1], [0], [0], [1], [0, 0, 1, 1], [], []>} : vector<2x32xf32>, vector<32x128xf32>, vector<2x128xf32> -> vector<2x128xf32>
    %c0_6 = arith.constant 0 : index
    %c0_7 = arith.constant 0 : index
    %6 = vector.load %arg3[%c0_6, %c0_7] : memref<1x128xf32, #tpu.memory_space<vmem>>, vector<1x128xf32>
    %7 = vector.broadcast %6 : vector<1x128xf32> to vector<2x128xf32>
    %8 = arith.addf %5, %7 : vector<2x128xf32>
    %c0_8 = arith.constant 0 : index
    %c0_9 = arith.constant 0 : index
    %9 = vector.load %arg4[%c0_8, %c0_9] : memref<2x128xf32, #tpu.memory_space<vmem>>, vector<2x128xf32>
    tpu.vector_store %arg4[%c0_8, %c0_9], %8 {strides = array<i32>} : memref<2x128xf32, #tpu.memory_space<vmem>>, vector<2x128xf32>,
    return
  }
  func.func @transform_0(%arg0: i32) -> (i32, i32, i32) {
    %c0_i32 = arith.constant 0 : i32
    %c0_i32_0 = arith.constant 0 : i32
    %c0_i32_1 = arith.constant 0 : i32
    return %arg0, %c0_i32, %c0_i32_0 : i32, i32, i32
  }
  func.func @transform_1(%arg0: i32) -> (i32, i32) {
    %c0_i32 = arith.constant 0 : i32
    %c0_i32_0 = arith.constant 0 : i32
    %c0_i32_1 = arith.constant 0 : i32
    return %c0_i32, %c0_i32_0 : i32, i32
  }
  func.func @transform_2(%arg0: i32) -> (i32, i32) {
    %c0_i32 = arith.constant 0 : i32
    %c0_i32_0 = arith.constant 0 : i32
    %c0_i32_1 = arith.constant 0 : i32
    return %c0_i32, %c0_i32_0 : i32, i32
  }
  func.func @transform_3(%arg0: i32) -> (i32, i32) {
    %c0_i32 = arith.constant 0 : i32
    %c0_i32_0 = arith.constant 0 : i32
    return %arg0, %c0_i32 : i32, i32
  }
}

</mosaic_0001>

<llo_original>
// kernel: baseline_forward.1
$region0: #{baseline_forward.1}
  #allocation0 [shape = 'u32[]', space=smem, size = 0x4, offset = 0x4, fixed_abs, tag = 'smem constant byte address 0x4 - core index']
  #allocation1 [shape = 'u32[144,128]{1,0:T(1,128)}', space=vmem, size = 0x12000, scoped, tag = 'internal scratch']
  %s0 = inlined_call_operand.vmem [shape: f32[2,32,256], index: 0, kind: input, shape index: {}]
  %s1 = inlined_call_operand.vmem [shape: f32[32,128], index: 1, kind: input, shape index: {}]
  %s2 = inlined_call_operand.vmem [shape: f32[1,128], index: 2, kind: input, shape index: {}]
  %s3 = inlined_call_operand.hbm [shape: f32[2,128], index: 3, kind: output, shape index: {}]
  %s4 = sld [smem:[#allocation0]]
  $region22: #{baseline_forward.1} parent=0
    _
  %s6 = ssub.s32 1, %s4
  %s7 = scalar_select 0, %s6, %s4
  $region1: #{baseline_forward.1} parent=0
    #allocation2 [shape = 'u8[1024]{0}', space=vmem, size = 0x400, scoped, tag = 'output window, operand 0, single buffered']
    #allocation3 [shape = 's32[1]{0}', space=sflag, size = 0x4, scoped, tag = 'scoped memory for baseline_forward.1']
    %8 = vsyncpa [#allocation3], 0
    // Predicated region
    $region2: #{baseline_forward.1} parent=1 // pred_check
      _
    $region3: #{baseline_forward.1} parent=1 // pred_check_branch
      %10 = sbr.rel (0) target = $region5
    $region4: #{baseline_forward.1} parent=1 // pred_region
      _
    $region5: #{baseline_forward.1} parent=1 // pred_fallthru
      _
    // Predicated region
    $region6: #{baseline_forward.1} parent=1 // pred_check
      _
    $region7: #{baseline_forward.1} parent=1 // pred_check_branch
      %12 = sbr.rel (0) target = $region9
    $region8: #{baseline_forward.1} parent=1 // pred_region
      _
    $region9: #{baseline_forward.1} parent=1 // pred_fallthru
      _
    // Predicated region
    $region10: #{baseline_forward.1} parent=1 // pred_check
      _
    $region11: #{baseline_forward.1} parent=1 // pred_check_branch
      %14 = sbr.rel (0) target = $region13
    $region12: #{baseline_forward.1} parent=1 // pred_region
      _
    $region13: #{baseline_forward.1} parent=1 // pred_fallthru
      _
    %v15 = vld [vmem:[%s0] sm:$0xff]
    %v16 = vld [vmem:[%s0 + $0x8] sm:$0xff]
    %v17 = vld [vmem:[%s0 + $0x10] sm:$0xff]
    %v18 = vld [vmem:[%s0 + $0x18] sm:$0xff]
    %v19 = vld [vmem:[%s0 + $0x20] sm:$0xff]
    %v20 = vld [vmem:[%s0 + $0x28] sm:$0xff]
    %v21 = vld [vmem:[%s0 + $0x30] sm:$0xff]
    %v22 = vld [vmem:[%s0 + $0x38] sm:$0xff]
    %v23 = vld [vmem:[%s0 + $0x40] sm:$0xff]
    %v24 = vld [vmem:[%s0 + $0x48] sm:$0xff]
    %v25 = vld [vmem:[%s0 + $0x50] sm:$0xff]
    %v26 = vld [vmem:[%s0 + $0x58] sm:$0xff]
    %v27 = vld [vmem:[%s0 + $0x60] sm:$0xff]
    %v28 = vld [vmem:[%s0 + $0x68] sm:$0xff]
    %v29 = vld [vmem:[%s0 + $0x70] sm:$0xff]
    %v30 = vld [vmem:[%s0 + $0x78] sm:$0xff]
    %v31 = vadd.f32 %v15, %v16
    %32 = vadd.xlane.f32.xlu0 %v31
    %v33 = vpop.xlane.xlu0 %32
    %v34 = vadd.f32 %v17, %v18
    %35 = vadd.xlane.f32.xlu0 %v34
    %v36 = vpop.xlane.xlu0 %35
    %v37 = vadd.f32 %v19, %v20
    %38 = vadd.xlane.f32.xlu0 %v37
    %v39 = vpop.xlane.xlu0 %38
    %v40 = vadd.f32 %v21, %v22
    %41 = vadd.xlane.f32.xlu0 %v40
    %v42 = vpop.xlane.xlu0 %41
    %v43 = vadd.f32 %v23, %v24
    %44 = vadd.xlane.f32.xlu0 %v43
    %v45 = vpop.xlane.xlu0 %44
    %v46 = vadd.f32 %v25, %v26
    %47 = vadd.xlane.f32.xlu0 %v46
    %v48 = vpop.xlane.xlu0 %47
    %v49 = vadd.f32 %v27, %v28
    %50 = vadd.xlane.f32.xlu0 %v49
    %v51 = vpop.xlane.xlu0 %50
    %v52 = vadd.f32 %v29, %v30
    %53 = vadd.xlane.f32.xlu0 %v52
    %v54 = vpop.xlane.xlu0 %53
    %v55 = vrcp.pop 256.0
    %v56 = vmul.f32 %v33, %v55
    %v57 = vmul.f32 %v36, %v55
    %v58 = vmul.f32 %v39, %v55
    %v59 = vmul.f32 %v42, %v55
    %v60 = vmul.f32 %v45, %v55
    %v61 = vmul.f32 %v48, %v55
    %v62 = vmul.f32 %v51, %v55
    %v63 = vmul.f32 %v54, %v55
    %v64 = vld [vmem:[%s1] sm:$0xff]
    %v65 = vld [vmem:[%s1 + $0x8] sm:$0xff]
    %v66 = vld [vmem:[%s1 + $0x10] sm:$0xff]
    %v67 = vld [vmem:[%s1 + $0x18] sm:$0xff]
    %v68 = vld [vmem:[%s2] sm:$0x1]
    %v70 = vlaneseq
    %v71 = vshrl.u32 %v70, 7
    %v72 = vsub.s32 0, %v71
    %v73 = vrot.slane %v68, %v72
    %v83 = vlaneseq
    %v84 = vand.u32 %v83, 127
    %v85 = vlaneseq
    %v86 = vshrl.u32 %v85, 7
    %v87 = vsub.s32 %v84, %v86
    %v88 = vrot.slane %v56, %v87
    %v89 = vadd.s32 %v84, 4294967288
    %v90 = vlaneseq
    %v91 = vshrl.u32 %v90, 7
    %v92 = vsub.s32 %v89, %v91
    %v93 = vrot.slane %v57, %v92
    %vm94 = vcmask 130112
    %v95 = vsel %vm94, %v93, %v88
    %v96 = vadd.s32 %v84, 4294967280
    %v97 = vlaneseq
    %v98 = vshrl.u32 %v97, 7
    %v99 = vsub.s32 %v96, %v98
    %v100 = vrot.slane %v58, %v99
    %vm101 = vcmask 195712
    %v102 = vsel %vm101, %v100, %v95
    %v103 = vadd.s32 %v84, 4294967272
    %v104 = vlaneseq
    %v105 = vshrl.u32 %v104, 7
    %v106 = vsub.s32 %v103, %v105
    %v107 = vrot.slane %v59, %v106
    %vm108 = vcmask 261312
    %v109 = vsel %vm108, %v107, %v102
    %v110 = vlaneseq
    %v111 = vshrl.u32 %v110, 7
    %v112 = vsub.s32 %v84, %v111
    %v113 = vrot.slane %v60, %v112
    %v114 = vlaneseq
    %v115 = vshrl.u32 %v114, 7
    %v116 = vsub.s32 %v89, %v115
    %v117 = vrot.slane %v61, %v116
    %v118 = vsel %vm94, %v117, %v113
    %v119 = vlaneseq
    %v120 = vshrl.u32 %v119, 7
    %v121 = vsub.s32 %v96, %v120
    %v122 = vrot.slane %v62, %v121
    %v123 = vsel %vm101, %v122, %v118
    %v124 = vlaneseq
    %v125 = vshrl.u32 %v124, 7
    %v126 = vsub.s32 %v103, %v125
    %v127 = vrot.slane %v63, %v126
    %v128 = vsel %vm108, %v127, %v123
    %vm129 = vcmask 1041409
    %v130 = vsel %vm129, %v128, %v109
    %vm131 = vcmask 261120
    %v132 = vsel %vm131, %v130, 0
    %134 = vmatprep.subr.mxu0 0.0
    %135 = vmatpush1.msra.mxu0 %v64
    %136 = vmatprep.subr.mxu0 0.0
    %137 = vmatpush1.msra.mxu0 %v65
    %138 = vmatprep.subr.mxu0 0.0
    %139 = vmatpush1.msra.mxu0 %v66
    %140 = vmatprep.subr.mxu0 0.0
    %141 = vmatpush1.msra.mxu0 %v67
    %142 = vmatprep.subr.mxu0 0.0
    %143 = vmatpush1.msra.mxu0 0.0
    %144 = vmatprep.subr.mxu0 0.0
    %145 = vmatpush1.msra.mxu0 0.0
    %146 = vmatprep.subr.mxu0 0.0
    %147 = vmatpush1.msra.mxu0 0.0
    %148 = vmatprep.subr.mxu0 0.0
    %149 = vmatpush1.msra.mxu0 0.0
    %150 = vmatprep.subr.mxu0 0.0
    %151 = vmatpush1.msra.mxu0 0.0
    %152 = vmatprep.subr.mxu0 0.0
    %153 = vmatpush1.msra.mxu0 0.0
    %154 = vmatprep.subr.mxu0 0.0
    %155 = vmatpush1.msra.mxu0 0.0
    %156 = vmatprep.subr.mxu0 0.0
    %157 = vmatpush1.msra.mxu0 0.0
    %158 = vmatprep.subr.mxu0 0.0
    %159 = vmatpush1.msra.mxu0 0.0
    %160 = vmatprep.subr.mxu0 0.0
    %161 = vmatpush1.msra.mxu0 0.0
    %162 = vmatprep.subr.mxu0 0.0
    %163 = vmatpush1.msra.mxu0 0.0
    %164 = vmatprep.subr.mxu0 0.0
    %165 = vmatpush1.msra.mxu0 0.0
    %166 = vmatprep.subr.mxu0 0.0
    %167 = vmatpush1.msra.mxu0 0.0
    %168 = vmatprep.subr.mxu0 0.0
    %169 = vmatpush1.msra.mxu0 0.0
    %170 = vmatprep.subr.mxu0 0.0
    %171 = vmatpush1.msra.mxu0 0.0
    %172 = vmatprep.subr.mxu0 0.0
    %173 = vmatpush1.msra.mxu0 0.0
    %174 = vmatprep.subr.mxu0 0.0
    %175 = vmatpush1.msra.mxu0 0.0
    %176 = vmatprep.subr.mxu0 0.0
    %177 = vmatpush1.msra.mxu0 0.0
    %178 = vmatprep.subr.mxu0 0.0
    %179 = vmatpush1.msra.mxu0 0.0
    %180 = vmatprep.subr.mxu0 0.0
    %181 = vmatpush1.msra.mxu0 0.0
    %182 = vmatprep.subr.mxu0 0.0
    %183 = vmatpush1.msra.mxu0 0.0
    %184 = vmatprep.subr.mxu0 0.0
    %185 = vmatpush1.msra.mxu0 0.0
    %186 = vmatprep.subr.mxu0 0.0
    %187 = vmatpush1.msra.mxu0 0.0
    %188 = vmatprep.subr.mxu0 0.0
    %189 = vmatpush1.msra.mxu0 0.0
    %190 = vmatprep.subr.mxu0 0.0
    %191 = vmatpush1.msra.mxu0 0.0
    %192 = vmatprep.subr.mxu0 0.0
    %193 = vmatpush1.msra.mxu0 0.0
    %194 = vmatprep.subr.mxu0 0.0
    %195 = vmatpush1.msra.mxu0 0.0
    %196 = vmatprep.subr.mxu0 0.0
    %197 = vmatpush1.msra.mxu0 0.0
    %198 = vmatprep.mubr.f32.mxu0 0.0
    %199 = vmatmul.mubr.f32.gmra.mrb[0].mxu0 %v132
    %v200 = vpop.f32.mrb[0].mxu0
    %v201 = vadd.f32 %v73, %v200
    %v202 = vpop.f32.mrb[0].mxu0
    %203 = vdwg.mxu0
    %204 = vst [vmem:[#allocation2] sm:$0x3] %v201
    // Predicated region
    $region14: #{baseline_forward.1} parent=1 // pred_check
      _
    $region15: #{baseline_forward.1} parent=1 // pred_check_branch
      %206 = sbr.rel (0) target = $region17
    $region16: #{baseline_forward.1} parent=1 // pred_region
      %s208 = ssub.s32 32, 32
      %209 = vsyncadd [#allocation3], %s208
      %s211 = sshll.u32 [#allocation2], 4
      %s212 = int_to_ptr.vmem [resolvable:$true] %s211
      %214 = dma.vmem_to_hbm [thread:$0]  %s212, 32, %s3, [#allocation3]
    $region17: #{baseline_forward.1} parent=1 // pred_fallthru
      _
    // Predicated region
    $region18: #{baseline_forward.1} parent=1 // pred_check
      _
    $region19: #{baseline_forward.1} parent=1 // pred_check_branch
      %216 = sbr.rel (0) target = $region21
    $region20: #{baseline_forward.1} parent=1 // pred_region
      %217 = dma.done [#allocation3], 32
    $region21: #{baseline_forward.1} parent=1 // pred_fallthru
      _
    %218 = vsyncpa [#allocation3], 1

</llo_original>
